<compile_context>
chip_gen: v6e
topology: v6e:2x2x1
jax: 0.10.0
libtpu: 0.0.40
codegen_flags: <defaults>
</compile_context>

<pallas_src>
import functools

import jax
import jax.numpy as jnp
from jax import lax
from jax.experimental import pallas as pl
from jax.experimental.pallas import tpu as pltpu


_LANE = 128
# Per-buffer W-panel budget, conservative so 2x (double-buffer) fits the
# default scoped-VMEM limit on all of v5e / v6e / v7x without raising
# vmem_limit_bytes.
_W_PANEL_BUDGET_BYTES = 4 * 1024 * 1024


# ----------------------------------------------------------------------------
# Tile selection helpers
# ----------------------------------------------------------------------------
def _tile_candidates(dim):
    """Divisors of `dim` that are multiples of 128 (lane-dense tiles)."""
    return [t for t in range(_LANE, dim + 1, _LANE) if dim % t == 0]


def _pick_tn(n):
    cands = _tile_candidates(n)
    assert cands, f"output dim {n} must be a multiple of {_LANE}"
    # Prefer >= 2 output tiles so both v7x TensorCores get work on the
    # "parallel" axis; otherwise take the full width.
    multi = [t for t in cands if n // t >= 2]
    return max(multi) if multi else max(cands)


# ----------------------------------------------------------------------------
# Kernels
# ----------------------------------------------------------------------------
def _matvec_kernel_fullk(transpose_w, y_ref, w_ref, o_ref):
    # Whole K resident: single MXU contraction, single unmasked store.
    dims = (((1,), (1,)), ((), ())) if transpose_w else (((1,), (0,)), ((), ()))
    o_ref[...] = lax.dot_general(
        y_ref[...], w_ref[...],
        dimension_numbers=dims,
        preferred_element_type=jnp.float32,
    ).astype(o_ref.dtype)


def _matvec_kernel_kgrid(transpose_w, tk, y_ref, w_ref, o_ref, acc_ref):
    # Large-K fallback: reduction over the last grid axis with f32 accumulator.
    k = pl.program_id(1)

    @pl.when(k == 0)
    def _():
        acc_ref[...] = jnp.zeros_like(acc_ref)

    start = pl.multiple_of(k * tk, tk)          # y is resident; slice in VMEM
    y_blk = y_ref[:, pl.ds(start, tk)]
    dims = (((1,), (1,)), ((), ())) if transpose_w else (((1,), (0,)), ((), ()))
    acc_ref[...] += lax.dot_general(
        y_blk, w_ref[...],
        dimension_numbers=dims,
        preferred_element_type=jnp.float32,
    )

    @pl.when(k == pl.num_programs(1) - 1)
    def _():
        o_ref[...] = acc_ref[...].astype(o_ref.dtype)


# ----------------------------------------------------------------------------
# Wrapper: out[B, N] = y @ w         (w: [K, N])   if not transpose_w
#          out[B, N] = y @ w.T       (w: [N, K])   if transpose_w
# ----------------------------------------------------------------------------
@functools.partial(jax.jit, static_argnames=("transpose_w",))
def pallas_matvec(y, w, *, transpose_w=False):
    B, K = y.shape
    if transpose_w:
        N, Kw = w.shape
    else:
        Kw, N = w.shape
    assert K == Kw, "contraction dims mismatch"
    assert K % _LANE == 0 and N % _LANE == 0, "K and N must be multiples of 128"

    # Stream narrow operands (bf16 weights -> bf16 LHS); accumulate in f32.
    y = y.astype(w.dtype)
    out_shape = jax.ShapeDtypeStruct((B, N), jnp.float32)
    itemsize = jnp.dtype(w.dtype).itemsize
    tn = _pick_tn(N)
    panel_bytes = K * tn * itemsize

    if panel_bytes <= _W_PANEL_BUDGET_BYTES:
        # Collapsed-reduction path: grid only over N tiles.
        grid = (N // tn,)
        w_spec = (
            pl.BlockSpec((tn, K), lambda j: (j, 0))
            if transpose_w
            else pl.BlockSpec((K, tn), lambda j: (0, j))
        )
        return pl.pallas_call(
            functools.partial(_matvec_kernel_fullk, transpose_w),
            out_shape=out_shape,
            grid_spec=pltpu.PrefetchScalarGridSpec(
                num_scalar_prefetch=0,
                grid=grid,
                in_specs=[
                    pl.BlockSpec((B, K), lambda j: (0, 0)),  # y resident (tiny)
                    w_spec,
                ],
                out_specs=pl.BlockSpec((B, tn), lambda j: (0, j)),
            ),
            compiler_params=pltpu.CompilerParams(
                dimension_semantics=("parallel",),
            ),
        )(y, w)

    # Large-K fallback: keep the reduction grid axis with big lane-dense tiles.
    # For very large tiles on v5e, raise vmem_limit_bytes (default scoped VMEM
    # there is only 16 MiB); the 4 MiB/panel budget below stays under it.
    tk_cands = [
        t for t in _tile_candidates(K)
        if t * tn * itemsize <= _W_PANEL_BUDGET_BYTES
    ]
    assert tk_cands, "no feasible K tile; shrink tn or raise the VMEM budget"
    tk = max(tk_cands)
    grid = (N // tn, K // tk)
    w_spec = (
        pl.BlockSpec((tn, tk), lambda j, k: (j, k))
        if transpose_w
        else pl.BlockSpec((tk, tn), lambda j, k: (k, j))
    )
    return pl.pallas_call(
        functools.partial(_matvec_kernel_kgrid, transpose_w, tk),
        out_shape=out_shape,
        grid_spec=pltpu.PrefetchScalarGridSpec(
            num_scalar_prefetch=0,
            grid=grid,
            in_specs=[
                pl.BlockSpec((B, K), lambda j, k: (0, 0)),   # y resident (tiny)
                w_spec,
            ],
            out_specs=pl.BlockSpec((B, tn), lambda j, k: (0, j)),
            scratch_shapes=[pltpu.VMEM((B, tn), jnp.float32)],
        ),
        compiler_params=pltpu.CompilerParams(
            dimension_semantics=("parallel", "arbitrary"),
        ),
    )(y, w)


# ----------------------------------------------------------------------------
# Synthetic linear physics:  A: R^n -> R^m  (single (m, n) matrix in HBM)
# ----------------------------------------------------------------------------
class LinearPhysics:
    def __init__(self, A, img_shape, weight_dtype=jnp.bfloat16):
        # One bf16 copy of A; no A.T is ever materialized (the transposed
        # contraction is expressed inside the kernel).
        self.A = jnp.asarray(A, dtype=weight_dtype)     # (m, n)
        self.img_shape = tuple(img_shape)               # (C, H, W)

    def apply_A(self, x_nchw):                          # x -> A x
        B = x_nchw.shape[0]
        x_flat = x_nchw.reshape(B, -1)                  # (B, n)
        return pallas_matvec(x_flat, self.A, transpose_w=True)   # (B, m), f32

    def A_adjoint(self, y):                             # y -> A^T y
        B = y.shape[0]
        out = pallas_matvec(y, self.A, transpose_w=False)         # (B, n), f32
        return out.reshape((B,) + self.img_shape)       # NCHW


# ----------------------------------------------------------------------------
# NeuralIteration (JAX port)
# ----------------------------------------------------------------------------
class NeuralIteration:
    def __init__(self):
        self.iterations = 1
        self.step_size = None
        self.blocks = None

    def init(self, backbone_blocks, step_size=1.0, iterations=1):
        self.iterations = iterations
        self.n_blocks = (
            len(backbone_blocks) if isinstance(backbone_blocks, list) else 1
        )
        # deterministic parameter init: step_size * ones(iterations)
        # TODO(synk): nn.Parameter / ModuleList registration has no Pallas
        # equivalent; parameters are kept as plain jnp arrays.
        self.step_size = step_size * jnp.ones((iterations,), dtype=jnp.float32)
        if self.n_blocks > 1:
            assert self.n_blocks == iterations, (
                "'# blocks' does not equal to 'iterations'"
            )
            self.blocks = list(backbone_blocks)
        else:
            self.blocks = [backbone_blocks]

    def forward(self, y, physics, x_init=None):
        # identical semantics to the PyTorch base class
        return physics.A_adjoint(y)

    @staticmethod
    def measurement_consistency_grad(physics, x, y):
        # A_adjoint(y - A(x)); device moves are no-ops in single-device JAX
        residual = y - physics.apply_A(x)
        return physics.A_adjoint(residual)


# ----------------------------------------------------------------------------
if __name__ == "__main__":
    key = jax.random.PRNGKey(0)
    k_a, k_y, k_x = jax.random.split(key, 3)

    # small shapes: batch=2, channels=4, spatial=16  -> n = 4*16*16 = 1024
    B, C, H, W = 2, 4, 16, 16
    n = C * H * W
    m = 512

    A32 = jax.random.normal(k_a, (m, n), dtype=jnp.float32) / jnp.sqrt(n)
    physics = LinearPhysics(A32, (C, H, W))     # stores bf16 copy of A

    y = jax.random.normal(k_y, (B, m), dtype=jnp.float32)
    x = jax.random.normal(k_x, (B, C, H, W), dtype=jnp.float32)

    model = NeuralIteration()
    model.init(backbone_blocks=None, step_size=1.0, iterations=1)

    # forward pass: A_adjoint(y)
    out = jax.block_until_ready(model.forward(y, physics))

    # measurement-consistency gradient (uses both kernel orientations)
    grad = jax.block_until_ready(
        NeuralIteration.measurement_consistency_grad(physics, x, y)
    )

    # reference in plain JAX, mirroring the kernel numerics
    # (bf16 operands, f32 accumulation)
    A_up = physics.A.astype(jnp.float32)                         # (m, n)
    y_bf = y.astype(jnp.bfloat16).astype(jnp.float32)
    x_bf = x.reshape(B, -1).astype(jnp.bfloat16).astype(jnp.float32)

    ref_out = (y_bf @ A_up).reshape(B, C, H, W)
    residual_ref = y - x_bf @ A_up.T
    res_bf = residual_ref.astype(jnp.bfloat16).astype(jnp.float32)
    ref_grad = (res_bf @ A_up).reshape(B, C, H, W)

    assert out.shape == (B, C, H, W) and out.dtype == jnp.float32
    assert grad.shape == (B, C, H, W) and grad.dtype == jnp.float32
    assert jnp.allclose(out, ref_out, atol=2e-2, rtol=2e-2)
    assert jnp.allclose(grad, ref_grad, atol=2e-2, rtol=2e-2)

    print("KERNEL_OK")
</pallas_src>

<mosaic_0001>
module attributes {stable_mosaic.version = 11 : i64} {
  func.func @_matvec_kernel_fullk(%arg0: i32, %arg1: memref<2x512xbf16, #tpu.memory_space<vmem>>, %arg2: memref<512x512xbf16, #tpu.memory_space<vmem>>, %arg3: memref<2x512xf32, #tpu.memory_space<vmem>>) attributes {dimension_semantics = [#tpu.dimension_semantics<parallel>], iteration_bounds = array<i64: 2>, scalar_prefetch = 0 : i64, scratch_operands = 0 : i64, tpu.core_type = #tpu.core_type<tc>, window_params = [{pipeline_mode = #tpu.pipeline_mode<synchronous>, transform_indices = @transform_0, window_bounds = array<i64: 2, 512>}, {transform_indices = @transform_1, window_bounds = array<i64: 512, 512>}, {transform_indices = @transform_2, window_bounds = array<i64: 2, 512>}]} {
    %c0 = arith.constant 0 : index
    %c0_0 = arith.constant 0 : index
    %0 = vector.load %arg1[%c0, %c0_0] : memref<2x512xbf16, #tpu.memory_space<vmem>>, vector<2x512xbf16>
    %c0_1 = arith.constant 0 : index
    %c0_2 = arith.constant 0 : index
    %1 = vector.load %arg2[%c0_1, %c0_2] : memref<512x512xbf16, #tpu.memory_space<vmem>>, vector<512x512xbf16>
    %cst = arith.constant dense<0.000000e+00> : vector<2x512xf32>
    %2 = tpu.matmul %0, %1, %cst {dimension_numbers = #tpu.dot_dimension_numbers<[1], [0], [0], [1], [0, 0, 1, 1], [], []>} : vector<2x512xbf16>, vector<512x512xbf16>, vector<2x512xf32> -> vector<2x512xf32>
    %c0_3 = arith.constant 0 : index
    %c0_4 = arith.constant 0 : index
    %3 = vector.load %arg3[%c0_3, %c0_4] : memref<2x512xf32, #tpu.memory_space<vmem>>, vector<2x512xf32>
    tpu.vector_store %arg3[%c0_3, %c0_4], %2 {strides = array<i32>} : memref<2x512xf32, #tpu.memory_space<vmem>>, vector<2x512xf32>,
    return
  }
  func.func @transform_0(%arg0: i32) -> (i32, i32) {
    %c0_i32 = arith.constant 0 : i32
    %c0_i32_0 = arith.constant 0 : i32
    %c0_i32_1 = arith.constant 0 : i32
    return %c0_i32, %c0_i32_0 : i32, i32
  }
  func.func @transform_1(%arg0: i32) -> (i32, i32) {
    %c0_i32 = arith.constant 0 : i32
    %c0_i32_0 = arith.constant 0 : i32
    return %c0_i32, %arg0 : i32, i32
  }
  func.func @transform_2(%arg0: i32) -> (i32, i32) {
    %c0_i32 = arith.constant 0 : i32
    %c0_i32_0 = arith.constant 0 : i32
    return %c0_i32, %arg0 : i32, i32
  }
}

</mosaic_0001>

<llo_original>
// kernel: pallas_matvec.1
$region0: #{pallas_matvec.1}
  #allocation0 [shape = 'u32[]', space=smem, size = 0x4, offset = 0x4, fixed_abs, tag = 'smem constant byte address 0x4 - core index']
  #allocation1 [shape = 'u32[144,128]{1,0:T(1,128)}', space=vmem, size = 0x12000, scoped, tag = 'internal scratch']
  %s0 = inlined_call_operand.vmem [shape: bf16[2,512], index: 0, kind: input, shape index: {}]
  %s1 = inlined_call_operand.hbm [shape: bf16[512,1024], index: 1, kind: input, shape index: {}]
  %s2 = inlined_call_operand.hbm [shape: f32[2,1024], index: 2, kind: output, shape index: {}]
  %s3 = sld [smem:[#allocation0]]
  $region45: #{pallas_matvec.1} parent=0
    _
  %s5 = ssub.s32 1, %s3
  %s6 = scalar_select 0, %s5, %s3
  $region1: #{pallas_matvec.1} parent=0
    #allocation2 [shape = 'u8[1048576]{0}', space=vmem, size = 0x100000, scoped, tag = 'input window, operand 1']
    #allocation3 [shape = 's32[2]{0}', space=sflag, size = 0x8, scoped, tag = 'scoped memory for pallas_matvec.1']
    #allocation4 [shape = 's32[2]{0}', space=sflag, size = 0x8, scoped, tag = 'scoped memory for pallas_matvec.1']
    #allocation5 [shape = 'u8[8192]{0}', space=vmem, size = 0x2000, scoped, tag = 'output window, operand 0']
    %7 = vsyncpa [#allocation3], 0
    %s8 = scalar_lea.sflag [#allocation3], 1
    %9 = vsyncpa %s8, 0
    %10 = vsyncpa [#allocation4], 0
    %s11 = scalar_lea.sflag [#allocation4], 1
    %12 = vsyncpa %s11, 0
    loop: start=0, step=1, limit=4
    $region2: #{pallas_matvec.1} parent=1 // loop_pre_header
      _
    $region3: #{pallas_matvec.1} parent=1 // loop_header
      %s14 = sphi 0, %s18
      %p15 = scmp.ge.s32.totalorder %s14, 4
      %s22 = sphi 0, %s22
      %s24 = sphi 0, %s22
      %s25 = sphi 0, %s24
      %s39 = sphi 0, %s25
      %s45 = sphi 0, %s47
      %s48 = sphi 0, %s45
      %s49 = sphi 0, %s48
      %s65 = sphi 0, %s49
      %s71 = sphi 0, %s73
      %s74 = sphi 0, %s71
      %s75 = sphi 0, %s74
      %s91 = sphi 0, %s75
    $region4: #{pallas_matvec.1} parent=1 // loop_header_branch
      %17 = sbr.rel (%p15) target = $region8
    $region5: #{pallas_matvec.1} parent=1 // loop_body
      %s19 = ssub.s32 %s14, 1
      %s20 = ssub.s32 %s14, 2
      %s21 = sadd.s32 %s14, 1
      %s23 = sadd.s32 %s22, 1
      %p26 = scmp.eq.s32.totalorder %s14, 1
      %p27 = scmp.ne.s32.totalorder %s22, %s24
      %p28 = scmp.eq.s32.totalorder %s14, 0
      %p29 = por %p27, %p28
      %p30 = scmp.ne.s32.totalorder %s22, %s24
      %p31 = scmp.eq.s32.totalorder %s19, 1
      %p32 = por %p30, %p31
      %p33 = scmp.ne.s32.totalorder %s24, %s25
      %p34 = scmp.eq.s32.totalorder %s19, 0
      %p35 = por %p33, %p34
      %p36 = scmp.ne.s32.totalorder %s24, %s25
      %p37 = scmp.eq.s32.totalorder %s20, 1
      %p38 = por %p36, %p37
      %p40 = scmp.ne.s32.totalorder %s25, %s39
      %p41 = scmp.eq.s32.totalorder %s20, 0
      %p42 = por %p40, %p41
      %s43 = ssub.s32 %s14, %s21
      %p44 = scmp.eq.s32.totalorder %s43, 0
      %s46 = sadd.s32 %s45, 1
      %s47 = scalar_select %p44, %s45, %s46
      %p50 = pneg %p44
      %p51 = scmp.eq.s32.totalorder %s14, 1
      %p52 = por %p50, %p51
      %p53 = scmp.ne.s32.totalorder %s45, %s48
      %p54 = scmp.eq.s32.totalorder %s14, 0
      %p55 = por %p53, %p54
      %p56 = scmp.ne.s32.totalorder %s45, %s48
      %p57 = scmp.eq.s32.totalorder %s19, 1
      %p58 = por %p56, %p57
      %p59 = scmp.ne.s32.totalorder %s48, %s49
      %p60 = scmp.eq.s32.totalorder %s19, 0
      %p61 = por %p59, %p60
      %p62 = scmp.ne.s32.totalorder %s48, %s49
      %p63 = scmp.eq.s32.totalorder %s20, 1
      %p64 = por %p62, %p63
      %p66 = scmp.ne.s32.totalorder %s49, %s65
      %p67 = scmp.eq.s32.totalorder %s20, 0
      %p68 = por %p66, %p67
      %s69 = ssub.s32 %s14, %s21
      %p70 = scmp.eq.s32.totalorder %s69, 0
      %s72 = sadd.s32 %s71, 1
      %s73 = scalar_select %p70, %s71, %s72
      %p76 = pneg %p70
      %p77 = scmp.eq.s32.totalorder %s14, 1
      %p78 = por %p76, %p77
      %p79 = scmp.ne.s32.totalorder %s71, %s74
      %p80 = scmp.eq.s32.totalorder %s14, 0
      %p81 = por %p79, %p80
      %p82 = scmp.ne.s32.totalorder %s71, %s74
      %p83 = scmp.eq.s32.totalorder %s19, 1
      %p84 = por %p82, %p83
      %p85 = scmp.ne.s32.totalorder %s74, %s75
      %p86 = scmp.eq.s32.totalorder %s19, 0
      %p87 = por %p85, %p86
      %p88 = scmp.ne.s32.totalorder %s74, %s75
      %p89 = scmp.eq.s32.totalorder %s20, 1
      %p90 = por %p88, %p89
      %p92 = scmp.ne.s32.totalorder %s75, %s91
      %p93 = scmp.eq.s32.totalorder %s20, 0
      %p94 = por %p92, %p93
      %p95 = scmp.le.s32.totalorder 1, %s14
      %p96 = scmp.lt.s32.totalorder %s14, 3
      %p97 = pnand %p95, %p96
      %p98 = pneg %p97
      // Predicated region
      $region9: #{pallas_matvec.1} parent=5 // pred_check
        _
      $region10: #{pallas_matvec.1} parent=5 // pred_check_branch
        %100 = sbr.rel (%p97) target = $region12
      $region11: #{pallas_matvec.1} parent=5 // pred_region
        %s101 = ssub.s32 %s14, 1
        // Predicated region
        $region13: #{pallas_matvec.1} parent=11 // pred_check
          %p102 = pneg %p35
        $region14: #{pallas_matvec.1} parent=11 // pred_check_branch
          %104 = sbr.rel (%p102) target = $region16
        $region15: #{pallas_matvec.1} parent=11 // pred_region
          _
        $region16: #{pallas_matvec.1} parent=11 // pred_fallthru
          _
      $region12: #{pallas_matvec.1} parent=5 // pred_fallthru
        _
      %p105 = scmp.lt.s32.totalorder %s14, 2
      // Predicated region
      $region17: #{pallas_matvec.1} parent=5 // pred_check
        %p106 = pneg %p105
      $region18: #{pallas_matvec.1} parent=5 // pred_check_branch
        %108 = sbr.rel (%p106) target = $region20
      $region19: #{pallas_matvec.1} parent=5 // pred_region
        // Predicated region
        $region21: #{pallas_matvec.1} parent=19 // pred_check
          %p109 = pneg %p55
        $region22: #{pallas_matvec.1} parent=19 // pred_check_branch
          %111 = sbr.rel (%p109) target = $region24
        $region23: #{pallas_matvec.1} parent=19 // pred_region
          %s112 = sand.u32 %s45, 1
          %s113 = scalar_lea.sflag [#allocation3], %s112
          %s114 = sand.u32 %s45, 1
          %s115 = smul.addr %s114, 1024
          %s116 = scalar_lea.vmem [#allocation2], %s115
          %s117 = smul.u32 4, %s14
          %s119 = ssub.s32 16384, 16384
          %120 = vsyncadd %s113, %s119
          %s121 = smul.addr %s117, 64
          %s122 = scalar_lea.hbm %s1, %s121
          %s123 = sshll.u32 %s116, 4
          %s124 = int_to_ptr.vmem [resolvable:$true] %s123
          %129 = dma.hbm_to_vmem [thread:$0]  %s122, 16384, %s124, %s113, 512, 256, 16
        $region24: #{pallas_matvec.1} parent=19 // pred_fallthru
          _
      $region20: #{pallas_matvec.1} parent=5 // pred_fallthru
        _
      %p130 = scmp.le.s32.totalorder 1, %s14
      %p131 = scmp.lt.s32.totalorder %s14, 3
      %p132 = pnand %p130, %p131
      %p133 = pneg %p132
      // Predicated region
      $region25: #{pallas_matvec.1} parent=5 // pred_check
        _
      $region26: #{pallas_matvec.1} parent=5 // pred_check_branch
        %135 = sbr.rel (%p132) target = $region28
      $region27: #{pallas_matvec.1} parent=5 // pred_region
        %s136 = ssub.s32 %s14, 1
        %s137 = sand.u32 %s48, 1
        %s138 = scalar_lea.sflag [#allocation3], %s137
        %s139 = sand.u32 %s48, 1
        %s140 = smul.addr %s139, 1024
        %s141 = scalar_lea.vmem [#allocation2], %s140
        // Predicated region
        $region29: #{pallas_matvec.1} parent=27 // pred_check
          %p142 = pneg %p61
        $region30: #{pallas_matvec.1} parent=27 // pred_check_branch
          %144 = sbr.rel (%p142) target = $region32
        $region31: #{pallas_matvec.1} parent=27 // pred_region
          %145 = dma.done %s138, 16384
        $region32: #{pallas_matvec.1} parent=27 // pred_fallthru
          _
        %p146 = pneg %p35
        %p147 = pneg %p32
        %s148 = sand.u32 %s48, 1
        %s149 = scalar_lea.sflag [#allocation3], %s148
        %s150 = sand.u32 %s48, 1
        %s151 = smul.addr %s150, 1024
        %s152 = scalar_lea.vmem [#allocation2], %s151
        %p153 = pneg %p61
        %p154 = pneg %p58
        %p155 = pneg %p87
        %p156 = pneg %p84
        %s157 = sand.u32 %s74, 1
        %s158 = scalar_lea.sflag [#allocation4], %s157
        %s159 = sand.u32 %s74, 1
        %s160 = smul.addr %s159, 8
        %s161 = scalar_lea.vmem [#allocation5], %s160
        %s162 = smul.u32 4, %s19
        %s163 = smul.u32 4, %s19
        %v164 = vld [vmem:[%s0] sm:$0xf]
        %v165 = vld [vmem:[%s141] sm:$0xff]
        %v166 = vld [vmem:[%s141 + $0x8] sm:$0xff]
        %v167 = vld [vmem:[%s141 + $0x10] sm:$0xff]
        %v168 = vld [vmem:[%s141 + $0x18] sm:$0xff]
        %v169 = vld [vmem:[%s141 + $0x20] sm:$0xff]
        %v170 = vld [vmem:[%s141 + $0x28] sm:$0xff]
        %v171 = vld [vmem:[%s141 + $0x30] sm:$0xff]
        %v172 = vld [vmem:[%s141 + $0x38] sm:$0xff]
        %v173 = vld [vmem:[%s141 + $0x40] sm:$0xff]
        %v174 = vld [vmem:[%s141 + $0x48] sm:$0xff]
        %v175 = vld [vmem:[%s141 + $0x50] sm:$0xff]
        %v176 = vld [vmem:[%s141 + $0x58] sm:$0xff]
        %v177 = vld [vmem:[%s141 + $0x60] sm:$0xff]
        %v178 = vld [vmem:[%s141 + $0x68] sm:$0xff]
        %v179 = vld [vmem:[%s141 + $0x70] sm:$0xff]
        %v180 = vld [vmem:[%s141 + $0x78] sm:$0xff]
        %v181 = vld [vmem:[%s141 + $0x80] sm:$0xff]
        %v182 = vld [vmem:[%s141 + $0x88] sm:$0xff]
        %v183 = vld [vmem:[%s141 + $0x90] sm:$0xff]
        %v184 = vld [vmem:[%s141 + $0x98] sm:$0xff]
        %v185 = vld [vmem:[%s141 + $0xa0] sm:$0xff]
        %v186 = vld [vmem:[%s141 + $0xa8] sm:$0xff]
        %v187 = vld [vmem:[%s141 + $0xb0] sm:$0xff]
        %v188 = vld [vmem:[%s141 + $0xb8] sm:$0xff]
        %v189 = vld [vmem:[%s141 + $0xc0] sm:$0xff]
        %v190 = vld [vmem:[%s141 + $0xc8] sm:$0xff]
        %v191 = vld [vmem:[%s141 + $0xd0] sm:$0xff]
        %v192 = vld [vmem:[%s141 + $0xd8] sm:$0xff]
        %v193 = vld [vmem:[%s141 + $0xe0] sm:$0xff]
        %v194 = vld [vmem:[%s141 + $0xe8] sm:$0xff]
        %v195 = vld [vmem:[%s141 + $0xf0] sm:$0xff]
        %v196 = vld [vmem:[%s141 + $0xf8] sm:$0xff]
        %v197 = vld [vmem:[%s141 + $0x100] sm:$0xff]
        %v198 = vld [vmem:[%s141 + $0x108] sm:$0xff]
        %v199 = vld [vmem:[%s141 + $0x110] sm:$0xff]
        %v200 = vld [vmem:[%s141 + $0x118] sm:$0xff]
        %v201 = vld [vmem:[%s141 + $0x120] sm:$0xff]
        %v202 = vld [vmem:[%s141 + $0x128] sm:$0xff]
        %v203 = vld [vmem:[%s141 + $0x130] sm:$0xff]
        %v204 = vld [vmem:[%s141 + $0x138] sm:$0xff]
        %v205 = vld [vmem:[%s141 + $0x140] sm:$0xff]
        %v206 = vld [vmem:[%s141 + $0x148] sm:$0xff]
        %v207 = vld [vmem:[%s141 + $0x150] sm:$0xff]
        %v208 = vld [vmem:[%s141 + $0x158] sm:$0xff]
        %v209 = vld [vmem:[%s141 + $0x160] sm:$0xff]
        %v210 = vld [vmem:[%s141 + $0x168] sm:$0xff]
        %v211 = vld [vmem:[%s141 + $0x170] sm:$0xff]
        %v212 = vld [vmem:[%s141 + $0x178] sm:$0xff]
        %v213 = vld [vmem:[%s141 + $0x180] sm:$0xff]
        %v214 = vld [vmem:[%s141 + $0x188] sm:$0xff]
        %v215 = vld [vmem:[%s141 + $0x190] sm:$0xff]
        %v216 = vld [vmem:[%s141 + $0x198] sm:$0xff]
        %v217 = vld [vmem:[%s141 + $0x1a0] sm:$0xff]
        %v218 = vld [vmem:[%s141 + $0x1a8] sm:$0xff]
        %v219 = vld [vmem:[%s141 + $0x1b0] sm:$0xff]
        %v220 = vld [vmem:[%s141 + $0x1b8] sm:$0xff]
        %v221 = vld [vmem:[%s141 + $0x1c0] sm:$0xff]
        %v222 = vld [vmem:[%s141 + $0x1c8] sm:$0xff]
        %v223 = vld [vmem:[%s141 + $0x1d0] sm:$0xff]
        %v224 = vld [vmem:[%s141 + $0x1d8] sm:$0xff]
        %v225 = vld [vmem:[%s141 + $0x1e0] sm:$0xff]
        %v226 = vld [vmem:[%s141 + $0x1e8] sm:$0xff]
        %v227 = vld [vmem:[%s141 + $0x1f0] sm:$0xff]
        %v228 = vld [vmem:[%s141 + $0x1f8] sm:$0xff]
        %v229 = vld [vmem:[%s141 + $0x200] sm:$0xff]
        %v230 = vld [vmem:[%s141 + $0x208] sm:$0xff]
        %v231 = vld [vmem:[%s141 + $0x210] sm:$0xff]
        %v232 = vld [vmem:[%s141 + $0x218] sm:$0xff]
        %v233 = vld [vmem:[%s141 + $0x220] sm:$0xff]
        %v234 = vld [vmem:[%s141 + $0x228] sm:$0xff]
        %v235 = vld [vmem:[%s141 + $0x230] sm:$0xff]
        %v236 = vld [vmem:[%s141 + $0x238] sm:$0xff]
        %v237 = vld [vmem:[%s141 + $0x240] sm:$0xff]
        %v238 = vld [vmem:[%s141 + $0x248] sm:$0xff]
        %v239 = vld [vmem:[%s141 + $0x250] sm:$0xff]
        %v240 = vld [vmem:[%s141 + $0x258] sm:$0xff]
        %v241 = vld [vmem:[%s141 + $0x260] sm:$0xff]
        %v242 = vld [vmem:[%s141 + $0x268] sm:$0xff]
        %v243 = vld [vmem:[%s141 + $0x270] sm:$0xff]
        %v244 = vld [vmem:[%s141 + $0x278] sm:$0xff]
        %v245 = vld [vmem:[%s141 + $0x280] sm:$0xff]
        %v246 = vld [vmem:[%s141 + $0x288] sm:$0xff]
        %v247 = vld [vmem:[%s141 + $0x290] sm:$0xff]
        %v248 = vld [vmem:[%s141 + $0x298] sm:$0xff]
        %v249 = vld [vmem:[%s141 + $0x2a0] sm:$0xff]
        %v250 = vld [vmem:[%s141 + $0x2a8] sm:$0xff]
        %v251 = vld [vmem:[%s141 + $0x2b0] sm:$0xff]
        %v252 = vld [vmem:[%s141 + $0x2b8] sm:$0xff]
        %v253 = vld [vmem:[%s141 + $0x2c0] sm:$0xff]
        %v254 = vld [vmem:[%s141 + $0x2c8] sm:$0xff]
        %v255 = vld [vmem:[%s141 + $0x2d0] sm:$0xff]
        %v256 = vld [vmem:[%s141 + $0x2d8] sm:$0xff]
        %v257 = vld [vmem:[%s141 + $0x2e0] sm:$0xff]
        %v258 = vld [vmem:[%s141 + $0x2e8] sm:$0xff]
        %v259 = vld [vmem:[%s141 + $0x2f0] sm:$0xff]
        %v260 = vld [vmem:[%s141 + $0x2f8] sm:$0xff]
        %v261 = vld [vmem:[%s141 + $0x300] sm:$0xff]
        %v262 = vld [vmem:[%s141 + $0x308] sm:$0xff]
        %v263 = vld [vmem:[%s141 + $0x310] sm:$0xff]
        %v264 = vld [vmem:[%s141 + $0x318] sm:$0xff]
        %v265 = vld [vmem:[%s141 + $0x320] sm:$0xff]
        %v266 = vld [vmem:[%s141 + $0x328] sm:$0xff]
        %v267 = vld [vmem:[%s141 + $0x330] sm:$0xff]
        %v268 = vld [vmem:[%s141 + $0x338] sm:$0xff]
        %v269 = vld [vmem:[%s141 + $0x340] sm:$0xff]
        %v270 = vld [vmem:[%s141 + $0x348] sm:$0xff]
        %v271 = vld [vmem:[%s141 + $0x350] sm:$0xff]
        %v272 = vld [vmem:[%s141 + $0x358] sm:$0xff]
        %v273 = vld [vmem:[%s141 + $0x360] sm:$0xff]
        %v274 = vld [vmem:[%s141 + $0x368] sm:$0xff]
        %v275 = vld [vmem:[%s141 + $0x370] sm:$0xff]
        %v276 = vld [vmem:[%s141 + $0x378] sm:$0xff]
        %v277 = vld [vmem:[%s141 + $0x380] sm:$0xff]
        %v278 = vld [vmem:[%s141 + $0x388] sm:$0xff]
        %v279 = vld [vmem:[%s141 + $0x390] sm:$0xff]
        %v280 = vld [vmem:[%s141 + $0x398] sm:$0xff]
        %v281 = vld [vmem:[%s141 + $0x3a0] sm:$0xff]
        %v282 = vld [vmem:[%s141 + $0x3a8] sm:$0xff]
        %v283 = vld [vmem:[%s141 + $0x3b0] sm:$0xff]
        %v284 = vld [vmem:[%s141 + $0x3b8] sm:$0xff]
        %v285 = vld [vmem:[%s141 + $0x3c0] sm:$0xff]
        %v286 = vld [vmem:[%s141 + $0x3c8] sm:$0xff]
        %v287 = vld [vmem:[%s141 + $0x3d0] sm:$0xff]
        %v288 = vld [vmem:[%s141 + $0x3d8] sm:$0xff]
        %v289 = vld [vmem:[%s141 + $0x3e0] sm:$0xff]
        %v290 = vld [vmem:[%s141 + $0x3e8] sm:$0xff]
        %v291 = vld [vmem:[%s141 + $0x3f0] sm:$0xff]
        %v292 = vld [vmem:[%s141 + $0x3f8] sm:$0xff]
        %v295 = vunpack.c.l.s4 1966171168
        %v296 = vunpack.c.0.s8 %v295
        %v297 = vlaneseq
        %v298 = vshrl.u32 %v297, 7
        %v299 = vsub.s32 %v296, %v298
        %v300 = vrot.slane %v164, %v299
        %v301 = vcombine.high %v300, %v300
        %v303 = vunpack.c.l.s4 1966171168
        %v304 = vunpack.c.0.s8 %v303
        %v305 = vlaneseq
        %v306 = vshrl.u32 %v305, 7
        %v307 = vsub.s32 %v304, %v306
        %v308 = vrot.slane %v300, %v307
        %v310 = vunpack.c.l.s4 1966171168
        %v311 = vunpack.c.0.s8 %v310
        %v312 = vlaneseq
        %v313 = vshrl.u32 %v312, 7
        %v314 = vsub.s32 %v311, %v313
        %v315 = vrot.slane %v301, %v314
        %v316 = vcombine.high %v308, %v308
        %v317 = vcombine.high %v315, %v315
        %v450 = vunpack.c.l.b16 %v165
        %v451 = vunpack.c.h.b16 %v165
        %v452 = vunpack.c.l.b16 %v166
        %v453 = vunpack.c.h.b16 %v166
        %v454 = vunpack.c.l.b16 %v167
        %v455 = vunpack.c.h.b16 %v167
        %v456 = vunpack.c.l.b16 %v168
        %v457 = vunpack.c.h.b16 %v168
        %v458 = vunpack.c.l.b16 %v169
        %v459 = vunpack.c.h.b16 %v169
        %v460 = vunpack.c.l.b16 %v170
        %v461 = vunpack.c.h.b16 %v170
        %v462 = vunpack.c.l.b16 %v171
        %v463 = vunpack.c.h.b16 %v171
        %v464 = vunpack.c.l.b16 %v172
        %v465 = vunpack.c.h.b16 %v172
        %v466 = vunpack.c.l.b16 %v173
        %v467 = vunpack.c.h.b16 %v173
        %v468 = vunpack.c.l.b16 %v174
        %v469 = vunpack.c.h.b16 %v174
        %v470 = vunpack.c.l.b16 %v175
        %v471 = vunpack.c.h.b16 %v175
        %v472 = vunpack.c.l.b16 %v176
        %v473 = vunpack.c.h.b16 %v176
        %v474 = vunpack.c.l.b16 %v177
        %v475 = vunpack.c.h.b16 %v177
        %v476 = vunpack.c.l.b16 %v178
        %v477 = vunpack.c.h.b16 %v178
        %v478 = vunpack.c.l.b16 %v179
        %v479 = vunpack.c.h.b16 %v179
        %v480 = vunpack.c.l.b16 %v180
        %v481 = vunpack.c.h.b16 %v180
        %v482 = vunpack.c.l.b16 %v181
        %v483 = vunpack.c.h.b16 %v181
        %v484 = vunpack.c.l.b16 %v182
        %v485 = vunpack.c.h.b16 %v182
        %v486 = vunpack.c.l.b16 %v183
        %v487 = vunpack.c.h.b16 %v183
        %v488 = vunpack.c.l.b16 %v184
        %v489 = vunpack.c.h.b16 %v184
        %v490 = vunpack.c.l.b16 %v185
        %v491 = vunpack.c.h.b16 %v185
        %v492 = vunpack.c.l.b16 %v186
        %v493 = vunpack.c.h.b16 %v186
        %v494 = vunpack.c.l.b16 %v187
        %v495 = vunpack.c.h.b16 %v187
        %v496 = vunpack.c.l.b16 %v188
        %v497 = vunpack.c.h.b16 %v188
        %v498 = vunpack.c.l.b16 %v189
        %v499 = vunpack.c.h.b16 %v189
        %v500 = vunpack.c.l.b16 %v190
        %v501 = vunpack.c.h.b16 %v190
        %v502 = vunpack.c.l.b16 %v191
        %v503 = vunpack.c.h.b16 %v191
        %v504 = vunpack.c.l.b16 %v192
        %v505 = vunpack.c.h.b16 %v192
        %v506 = vunpack.c.l.b16 %v193
        %v507 = vunpack.c.h.b16 %v193
        %v508 = vunpack.c.l.b16 %v194
        %v509 = vunpack.c.h.b16 %v194
        %v510 = vunpack.c.l.b16 %v195
        %v511 = vunpack.c.h.b16 %v195
        %v512 = vunpack.c.l.b16 %v196
        %v513 = vunpack.c.h.b16 %v196
        %v514 = vunpack.c.l.b16 %v197
        %v515 = vunpack.c.h.b16 %v197
        %v516 = vunpack.c.l.b16 %v198
        %v517 = vunpack.c.h.b16 %v198
        %v518 = vunpack.c.l.b16 %v199
        %v519 = vunpack.c.h.b16 %v199
        %v520 = vunpack.c.l.b16 %v200
        %v521 = vunpack.c.h.b16 %v200
        %v522 = vunpack.c.l.b16 %v201
        %v523 = vunpack.c.h.b16 %v201
        %v524 = vunpack.c.l.b16 %v202
        %v525 = vunpack.c.h.b16 %v202
        %v526 = vunpack.c.l.b16 %v203
        %v527 = vunpack.c.h.b16 %v203
        %v528 = vunpack.c.l.b16 %v204
        %v529 = vunpack.c.h.b16 %v204
        %v530 = vunpack.c.l.b16 %v205
        %v531 = vunpack.c.h.b16 %v205
        %v532 = vunpack.c.l.b16 %v206
        %v533 = vunpack.c.h.b16 %v206
        %v534 = vunpack.c.l.b16 %v207
        %v535 = vunpack.c.h.b16 %v207
        %v536 = vunpack.c.l.b16 %v208
        %v537 = vunpack.c.h.b16 %v208
        %v538 = vunpack.c.l.b16 %v209
        %v539 = vunpack.c.h.b16 %v209
        %v540 = vunpack.c.l.b16 %v210
        %v541 = vunpack.c.h.b16 %v210
        %v542 = vunpack.c.l.b16 %v211
        %v543 = vunpack.c.h.b16 %v211
        %v544 = vunpack.c.l.b16 %v212
        %v545 = vunpack.c.h.b16 %v212
        %v546 = vunpack.c.l.b16 %v213
        %v547 = vunpack.c.h.b16 %v213
        %v548 = vunpack.c.l.b16 %v214
        %v549 = vunpack.c.h.b16 %v214
        %v550 = vunpack.c.l.b16 %v215
        %v551 = vunpack.c.h.b16 %v215
        %v552 = vunpack.c.l.b16 %v216
        %v553 = vunpack.c.h.b16 %v216
        %v554 = vunpack.c.l.b16 %v217
        %v555 = vunpack.c.h.b16 %v217
        %v556 = vunpack.c.l.b16 %v218
        %v557 = vunpack.c.h.b16 %v218
        %v558 = vunpack.c.l.b16 %v219
        %v559 = vunpack.c.h.b16 %v219
        %v560 = vunpack.c.l.b16 %v220
        %v561 = vunpack.c.h.b16 %v220
        %v562 = vunpack.c.l.b16 %v221
        %v563 = vunpack.c.h.b16 %v221
        %v564 = vunpack.c.l.b16 %v222
        %v565 = vunpack.c.h.b16 %v222
        %v566 = vunpack.c.l.b16 %v223
        %v567 = vunpack.c.h.b16 %v223
        %v568 = vunpack.c.l.b16 %v224
        %v569 = vunpack.c.h.b16 %v224
        %v570 = vunpack.c.l.b16 %v225
        %v571 = vunpack.c.h.b16 %v225
        %v572 = vunpack.c.l.b16 %v226
        %v573 = vunpack.c.h.b16 %v226
        %v574 = vunpack.c.l.b16 %v227
        %v575 = vunpack.c.h.b16 %v227
        %v576 = vunpack.c.l.b16 %v228
        %v577 = vunpack.c.h.b16 %v228
        %v578 = vunpack.c.l.b16 %v229
        %v579 = vunpack.c.h.b16 %v229
        %v580 = vunpack.c.l.b16 %v230
        %v581 = vunpack.c.h.b16 %v230
        %v582 = vunpack.c.l.b16 %v231
        %v583 = vunpack.c.h.b16 %v231
        %v584 = vunpack.c.l.b16 %v232
        %v585 = vunpack.c.h.b16 %v232
        %v586 = vunpack.c.l.b16 %v233
        %v587 = vunpack.c.h.b16 %v233
        %v588 = vunpack.c.l.b16 %v234
        %v589 = vunpack.c.h.b16 %v234
        %v590 = vunpack.c.l.b16 %v235
        %v591 = vunpack.c.h.b16 %v235
        %v592 = vunpack.c.l.b16 %v236
        %v593 = vunpack.c.h.b16 %v236
        %v594 = vunpack.c.l.b16 %v237
        %v595 = vunpack.c.h.b16 %v237
        %v596 = vunpack.c.l.b16 %v238
        %v597 = vunpack.c.h.b16 %v238
        %v598 = vunpack.c.l.b16 %v239
        %v599 = vunpack.c.h.b16 %v239
        %v600 = vunpack.c.l.b16 %v240
        %v601 = vunpack.c.h.b16 %v240
        %v602 = vunpack.c.l.b16 %v241
        %v603 = vunpack.c.h.b16 %v241
        %v604 = vunpack.c.l.b16 %v242
        %v605 = vunpack.c.h.b16 %v242
        %v606 = vunpack.c.l.b16 %v243
        %v607 = vunpack.c.h.b16 %v243
        %v608 = vunpack.c.l.b16 %v244
        %v609 = vunpack.c.h.b16 %v244
        %v610 = vunpack.c.l.b16 %v245
        %v611 = vunpack.c.h.b16 %v245
        %v612 = vunpack.c.l.b16 %v246
        %v613 = vunpack.c.h.b16 %v246
        %v614 = vunpack.c.l.b16 %v247
        %v615 = vunpack.c.h.b16 %v247
        %v616 = vunpack.c.l.b16 %v248
        %v617 = vunpack.c.h.b16 %v248
        %v618 = vunpack.c.l.b16 %v249
        %v619 = vunpack.c.h.b16 %v249
        %v620 = vunpack.c.l.b16 %v250
        %v621 = vunpack.c.h.b16 %v250
        %v622 = vunpack.c.l.b16 %v251
        %v623 = vunpack.c.h.b16 %v251
        %v624 = vunpack.c.l.b16 %v252
        %v625 = vunpack.c.h.b16 %v252
        %v626 = vunpack.c.l.b16 %v253
        %v627 = vunpack.c.h.b16 %v253
        %v628 = vunpack.c.l.b16 %v254
        %v629 = vunpack.c.h.b16 %v254
        %v630 = vunpack.c.l.b16 %v255
        %v631 = vunpack.c.h.b16 %v255
        %v632 = vunpack.c.l.b16 %v256
        %v633 = vunpack.c.h.b16 %v256
        %v634 = vunpack.c.l.b16 %v257
        %v635 = vunpack.c.h.b16 %v257
        %v636 = vunpack.c.l.b16 %v258
        %v637 = vunpack.c.h.b16 %v258
        %v638 = vunpack.c.l.b16 %v259
        %v639 = vunpack.c.h.b16 %v259
        %v640 = vunpack.c.l.b16 %v260
        %v641 = vunpack.c.h.b16 %v260
        %v642 = vunpack.c.l.b16 %v261
        %v643 = vunpack.c.h.b16 %v261
        %v644 = vunpack.c.l.b16 %v262
        %v645 = vunpack.c.h.b16 %v262
        %v646 = vunpack.c.l.b16 %v263
        %v647 = vunpack.c.h.b16 %v263
        %v648 = vunpack.c.l.b16 %v264
        %v649 = vunpack.c.h.b16 %v264
        %v650 = vunpack.c.l.b16 %v265
        %v651 = vunpack.c.h.b16 %v265
        %v652 = vunpack.c.l.b16 %v266
        %v653 = vunpack.c.h.b16 %v266
        %v654 = vunpack.c.l.b16 %v267
        %v655 = vunpack.c.h.b16 %v267
        %v656 = vunpack.c.l.b16 %v268
        %v657 = vunpack.c.h.b16 %v268
        %v658 = vunpack.c.l.b16 %v269
        %v659 = vunpack.c.h.b16 %v269
        %v660 = vunpack.c.l.b16 %v270
        %v661 = vunpack.c.h.b16 %v270
        %v662 = vunpack.c.l.b16 %v271
        %v663 = vunpack.c.h.b16 %v271
        %v664 = vunpack.c.l.b16 %v272
        %v665 = vunpack.c.h.b16 %v272
        %v666 = vunpack.c.l.b16 %v273
        %v667 = vunpack.c.h.b16 %v273
        %v668 = vunpack.c.l.b16 %v274
        %v669 = vunpack.c.h.b16 %v274
        %v670 = vunpack.c.l.b16 %v275
        %v671 = vunpack.c.h.b16 %v275
        %v672 = vunpack.c.l.b16 %v276
        %v673 = vunpack.c.h.b16 %v276
        %v674 = vunpack.c.l.b16 %v277
        %v675 = vunpack.c.h.b16 %v277
        %v676 = vunpack.c.l.b16 %v278
        %v677 = vunpack.c.h.b16 %v278
        %v678 = vunpack.c.l.b16 %v279
        %v679 = vunpack.c.h.b16 %v279
        %v680 = vunpack.c.l.b16 %v280
        %v681 = vunpack.c.h.b16 %v280
        %v682 = vunpack.c.l.b16 %v281
        %v683 = vunpack.c.h.b16 %v281
        %v684 = vunpack.c.l.b16 %v282
        %v685 = vunpack.c.h.b16 %v282
        %v686 = vunpack.c.l.b16 %v283
        %v687 = vunpack.c.h.b16 %v283
        %v688 = vunpack.c.l.b16 %v284
        %v689 = vunpack.c.h.b16 %v284
        %v690 = vunpack.c.l.b16 %v285
        %v691 = vunpack.c.h.b16 %v285
        %v692 = vunpack.c.l.b16 %v286
        %v693 = vunpack.c.h.b16 %v286
        %v694 = vunpack.c.l.b16 %v287
        %v695 = vunpack.c.h.b16 %v287
        %v696 = vunpack.c.l.b16 %v288
        %v697 = vunpack.c.h.b16 %v288
        %v698 = vunpack.c.l.b16 %v289
        %v699 = vunpack.c.h.b16 %v289
        %v700 = vunpack.c.l.b16 %v290
        %v701 = vunpack.c.h.b16 %v290
        %v702 = vunpack.c.l.b16 %v291
        %v703 = vunpack.c.h.b16 %v291
        %v704 = vunpack.c.l.b16 %v292
        %v705 = vunpack.c.h.b16 %v292
        %v706 = vpack.c.b16 %v454, %v450
        %v707 = vpack.c.b16 %v455, %v451
        %v708 = vpack.c.b16 %v456, %v452
        %v709 = vpack.c.b16 %v457, %v453
        %v710 = vpack.c.b16 %v462, %v458
        %v711 = vpack.c.b16 %v463, %v459
        %v712 = vpack.c.b16 %v464, %v460
        %v713 = vpack.c.b16 %v465, %v461
        %v714 = vpack.c.b16 %v470, %v466
        %v715 = vpack.c.b16 %v471, %v467
        %v716 = vpack.c.b16 %v472, %v468
        %v717 = vpack.c.b16 %v473, %v469
        %v718 = vpack.c.b16 %v478, %v474
        %v719 = vpack.c.b16 %v479, %v475
        %v720 = vpack.c.b16 %v480, %v476
        %v721 = vpack.c.b16 %v481, %v477
        %v722 = vpack.c.b16 %v486, %v482
        %v723 = vpack.c.b16 %v487, %v483
        %v724 = vpack.c.b16 %v488, %v484
        %v725 = vpack.c.b16 %v489, %v485
        %v726 = vpack.c.b16 %v494, %v490
        %v727 = vpack.c.b16 %v495, %v491
        %v728 = vpack.c.b16 %v496, %v492
        %v729 = vpack.c.b16 %v497, %v493
        %v730 = vpack.c.b16 %v502, %v498
        %v731 = vpack.c.b16 %v503, %v499
        %v732 = vpack.c.b16 %v504, %v500
        %v733 = vpack.c.b16 %v505, %v501
        %v734 = vpack.c.b16 %v510, %v506
        %v735 = vpack.c.b16 %v511, %v507
        %v736 = vpack.c.b16 %v512, %v508
        %v737 = vpack.c.b16 %v513, %v509
        %v738 = vpack.c.b16 %v518, %v514
        %v739 = vpack.c.b16 %v519, %v515
        %v740 = vpack.c.b16 %v520, %v516
        %v741 = vpack.c.b16 %v521, %v517
        %v742 = vpack.c.b16 %v526, %v522
        %v743 = vpack.c.b16 %v527, %v523
        %v744 = vpack.c.b16 %v528, %v524
        %v745 = vpack.c.b16 %v529, %v525
        %v746 = vpack.c.b16 %v534, %v530
        %v747 = vpack.c.b16 %v535, %v531
        %v748 = vpack.c.b16 %v536, %v532
        %v749 = vpack.c.b16 %v537, %v533
        %v750 = vpack.c.b16 %v542, %v538
        %v751 = vpack.c.b16 %v543, %v539
        %v752 = vpack.c.b16 %v544, %v540
        %v753 = vpack.c.b16 %v545, %v541
        %v754 = vpack.c.b16 %v550, %v546
        %v755 = vpack.c.b16 %v551, %v547
        %v756 = vpack.c.b16 %v552, %v548
        %v757 = vpack.c.b16 %v553, %v549
        %v758 = vpack.c.b16 %v558, %v554
        %v759 = vpack.c.b16 %v559, %v555
        %v760 = vpack.c.b16 %v560, %v556
        %v761 = vpack.c.b16 %v561, %v557
        %v762 = vpack.c.b16 %v566, %v562
        %v763 = vpack.c.b16 %v567, %v563
        %v764 = vpack.c.b16 %v568, %v564
        %v765 = vpack.c.b16 %v569, %v565
        %v766 = vpack.c.b16 %v574, %v570
        %v767 = vpack.c.b16 %v575, %v571
        %v768 = vpack.c.b16 %v576, %v572
        %v769 = vpack.c.b16 %v577, %v573
        %v770 = vpack.c.b16 %v582, %v578
        %v771 = vpack.c.b16 %v583, %v579
        %v772 = vpack.c.b16 %v584, %v580
        %v773 = vpack.c.b16 %v585, %v581
        %v774 = vpack.c.b16 %v590, %v586
        %v775 = vpack.c.b16 %v591, %v587
        %v776 = vpack.c.b16 %v592, %v588
        %v777 = vpack.c.b16 %v593, %v589
        %v778 = vpack.c.b16 %v598, %v594
        %v779 = vpack.c.b16 %v599, %v595
        %v780 = vpack.c.b16 %v600, %v596
        %v781 = vpack.c.b16 %v601, %v597
        %v782 = vpack.c.b16 %v606, %v602
        %v783 = vpack.c.b16 %v607, %v603
        %v784 = vpack.c.b16 %v608, %v604
        %v785 = vpack.c.b16 %v609, %v605
        %v786 = vpack.c.b16 %v614, %v610
        %v787 = vpack.c.b16 %v615, %v611
        %v788 = vpack.c.b16 %v616, %v612
        %v789 = vpack.c.b16 %v617, %v613
        %v790 = vpack.c.b16 %v622, %v618
        %v791 = vpack.c.b16 %v623, %v619
        %v792 = vpack.c.b16 %v624, %v620
        %v793 = vpack.c.b16 %v625, %v621
        %v794 = vpack.c.b16 %v630, %v626
        %v795 = vpack.c.b16 %v631, %v627
        %v796 = vpack.c.b16 %v632, %v628
        %v797 = vpack.c.b16 %v633, %v629
        %v798 = vpack.c.b16 %v638, %v634
        %v799 = vpack.c.b16 %v639, %v635
        %v800 = vpack.c.b16 %v640, %v636
        %v801 = vpack.c.b16 %v641, %v637
        %v802 = vpack.c.b16 %v646, %v642
        %v803 = vpack.c.b16 %v647, %v643
        %v804 = vpack.c.b16 %v648, %v644
        %v805 = vpack.c.b16 %v649, %v645
        %v806 = vpack.c.b16 %v654, %v650
        %v807 = vpack.c.b16 %v655, %v651
        %v808 = vpack.c.b16 %v656, %v652
        %v809 = vpack.c.b16 %v657, %v653
        %v810 = vpack.c.b16 %v662, %v658
        %v811 = vpack.c.b16 %v663, %v659
        %v812 = vpack.c.b16 %v664, %v660
        %v813 = vpack.c.b16 %v665, %v661
        %v814 = vpack.c.b16 %v670, %v666
        %v815 = vpack.c.b16 %v671, %v667
        %v816 = vpack.c.b16 %v672, %v668
        %v817 = vpack.c.b16 %v673, %v669
        %v818 = vpack.c.b16 %v678, %v674
        %v819 = vpack.c.b16 %v679, %v675
        %v820 = vpack.c.b16 %v680, %v676
        %v821 = vpack.c.b16 %v681, %v677
        %v822 = vpack.c.b16 %v686, %v682
        %v823 = vpack.c.b16 %v687, %v683
        %v824 = vpack.c.b16 %v688, %v684
        %v825 = vpack.c.b16 %v689, %v685
        %v826 = vpack.c.b16 %v694, %v690
        %v827 = vpack.c.b16 %v695, %v691
        %v828 = vpack.c.b16 %v696, %v692
        %v829 = vpack.c.b16 %v697, %v693
        %v830 = vpack.c.b16 %v702, %v698
        %v831 = vpack.c.b16 %v703, %v699
        %v832 = vpack.c.b16 %v704, %v700
        %v833 = vpack.c.b16 %v705, %v701
        %962 = vmatprep.subr.bf16.mxu0 %v735
        %963 = vmatpush1.bf16.msra.mxu0 %v734
        %964 = vmatprep.subr.bf16.mxu0 %v731
        %965 = vmatpush1.bf16.msra.mxu0 %v730
        %966 = vmatprep.subr.bf16.mxu0 %v727
        %967 = vmatpush1.bf16.msra.mxu0 %v726
        %968 = vmatprep.subr.bf16.mxu0 %v723
        %969 = vmatpush1.bf16.msra.mxu0 %v722
        %970 = vmatprep.subr.bf16.mxu0 %v719
        %971 = vmatpush1.bf16.msra.mxu0 %v718
        %972 = vmatprep.subr.bf16.mxu0 %v715
        %973 = vmatpush1.bf16.msra.mxu0 %v714
        %974 = vmatprep.subr.bf16.mxu0 %v711
        %975 = vmatpush1.bf16.msra.mxu0 %v710
        %976 = vmatprep.subr.bf16.mxu0 %v707
        %977 = vmatpush1.bf16.msra.mxu0 %v706
        %978 = vmatprep.subr.bf16.mxu0 %v767
        %979 = vmatpush2.bf16.msra.mxu0 %v766
        %980 = vmatprep.subr.bf16.mxu0 %v763
        %981 = vmatpush2.bf16.msra.mxu0 %v762
        %982 = vmatprep.subr.bf16.mxu0 %v759
        %983 = vmatpush2.bf16.msra.mxu0 %v758
        %984 = vmatprep.subr.bf16.mxu0 %v755
        %985 = vmatpush2.bf16.msra.mxu0 %v754
        %986 = vmatprep.subr.bf16.mxu0 %v751
        %987 = vmatpush2.bf16.msra.mxu0 %v750
        %988 = vmatprep.subr.bf16.mxu0 %v747
        %989 = vmatpush2.bf16.msra.mxu0 %v746
        %990 = vmatprep.subr.bf16.mxu0 %v743
        %991 = vmatpush2.bf16.msra.mxu0 %v742
        %992 = vmatprep.subr.bf16.mxu0 %v739
        %993 = vmatpush2.bf16.msra.mxu0 %v738
        %994 = vmatprep.mubr.bf16.mxu0 %v315
        %995 = vmatmul.mubr.bf16.gmra.mxu0 %v308
        %v996 = vpop.f32.mrf.mxu0
        %v997 = vadd.f32 0.0, %v996
        %v998 = vpop.f32.mrf.mxu0
        %v999 = vadd.f32 0.0, %v998
        %v1000 = vpop.f32.mrf.mxu0
        %v1001 = vpop.f32.mrf.mxu0
        %1002 = vdwg.mxu0
        %1003 = vmatprep.subr.bf16.mxu0 %v799
        %1004 = vmatpush1.bf16.msra.mxu0 %v798
        %1005 = vmatprep.subr.bf16.mxu0 %v795
        %1006 = vmatpush1.bf16.msra.mxu0 %v794
        %1007 = vmatprep.subr.bf16.mxu0 %v791
        %1008 = vmatpush1.bf16.msra.mxu0 %v790
        %1009 = vmatprep.subr.bf16.mxu0 %v787
        %1010 = vmatpush1.bf16.msra.mxu0 %v786
        %1011 = vmatprep.subr.bf16.mxu0 %v783
        %1012 = vmatpush1.bf16.msra.mxu0 %v782
        %1013 = vmatprep.subr.bf16.mxu0 %v779
        %1014 = vmatpush1.bf16.msra.mxu0 %v778
        %1015 = vmatprep.subr.bf16.mxu0 %v775
        %1016 = vmatpush1.bf16.msra.mxu0 %v774
        %1017 = vmatprep.subr.bf16.mxu0 %v771
        %1018 = vmatpush1.bf16.msra.mxu0 %v770
        %1019 = vmatprep.subr.bf16.mxu0 %v831
        %1020 = vmatpush2.bf16.msra.mxu0 %v830
        %1021 = vmatprep.subr.bf16.mxu0 %v827
        %1022 = vmatpush2.bf16.msra.mxu0 %v826
        %1023 = vmatprep.subr.bf16.mxu0 %v823
        %1024 = vmatpush2.bf16.msra.mxu0 %v822
        %1025 = vmatprep.subr.bf16.mxu0 %v819
        %1026 = vmatpush2.bf16.msra.mxu0 %v818
        %1027 = vmatprep.subr.bf16.mxu0 %v815
        %1028 = vmatpush2.bf16.msra.mxu0 %v814
        %1029 = vmatprep.subr.bf16.mxu0 %v811
        %1030 = vmatpush2.bf16.msra.mxu0 %v810
        %1031 = vmatprep.subr.bf16.mxu0 %v807
        %1032 = vmatpush2.bf16.msra.mxu0 %v806
        %1033 = vmatprep.subr.bf16.mxu0 %v803
        %1034 = vmatpush2.bf16.msra.mxu0 %v802
        %1035 = vmatprep.mubr.bf16.mxu0 %v317
        %1036 = vmatmul.mubr.bf16.gmra.mxu0 %v316
        %v1037 = vpop.f32.mrf.mxu0
        %v1038 = vadd.f32 %v997, %v1037
        %v1039 = vpop.f32.mrf.mxu0
        %v1040 = vadd.f32 %v999, %v1039
        %v1041 = vpop.f32.mrf.mxu0
        %v1042 = vpop.f32.mrf.mxu0
        %1043 = vdwg.mxu0
        %1044 = vmatprep.subr.bf16.mxu0 %v737
        %1045 = vmatpush1.bf16.msra.mxu0 %v736
        %1046 = vmatprep.subr.bf16.mxu0 %v733
        %1047 = vmatpush1.bf16.msra.mxu0 %v732
        %1048 = vmatprep.subr.bf16.mxu0 %v729
        %1049 = vmatpush1.bf16.msra.mxu0 %v728
        %1050 = vmatprep.subr.bf16.mxu0 %v725
        %1051 = vmatpush1.bf16.msra.mxu0 %v724
        %1052 = vmatprep.subr.bf16.mxu0 %v721
        %1053 = vmatpush1.bf16.msra.mxu0 %v720
        %1054 = vmatprep.subr.bf16.mxu0 %v717
        %1055 = vmatpush1.bf16.msra.mxu0 %v716
        %1056 = vmatprep.subr.bf16.mxu0 %v713
        %1057 = vmatpush1.bf16.msra.mxu0 %v712
        %1058 = vmatprep.subr.bf16.mxu0 %v709
        %1059 = vmatpush1.bf16.msra.mxu0 %v708
        %1060 = vmatprep.subr.bf16.mxu0 %v769
        %1061 = vmatpush2.bf16.msra.mxu0 %v768
        %1062 = vmatprep.subr.bf16.mxu0 %v765
        %1063 = vmatpush2.bf16.msra.mxu0 %v764
        %1064 = vmatprep.subr.bf16.mxu0 %v761
        %1065 = vmatpush2.bf16.msra.mxu0 %v760
        %1066 = vmatprep.subr.bf16.mxu0 %v757
        %1067 = vmatpush2.bf16.msra.mxu0 %v756
        %1068 = vmatprep.subr.bf16.mxu0 %v753
        %1069 = vmatpush2.bf16.msra.mxu0 %v752
        %1070 = vmatprep.subr.bf16.mxu0 %v749
        %1071 = vmatpush2.bf16.msra.mxu0 %v748
        %1072 = vmatprep.subr.bf16.mxu0 %v745
        %1073 = vmatpush2.bf16.msra.mxu0 %v744
        %1074 = vmatprep.subr.bf16.mxu0 %v741
        %1075 = vmatpush2.bf16.msra.mxu0 %v740
        %1076 = vmatprep.mubr.bf16.mxu0 %v315
        %1077 = vmatmul.mubr.bf16.gmra.mxu0 %v308
        %v1078 = vpop.f32.mrf.mxu0
        %v1079 = vadd.f32 0.0, %v1078
        %v1080 = vpop.f32.mrf.mxu0
        %v1081 = vadd.f32 0.0, %v1080
        %v1082 = vpop.f32.mrf.mxu0
        %v1083 = vpop.f32.mrf.mxu0
        %1084 = vdwg.mxu0
        %1085 = vmatprep.subr.bf16.mxu0 %v801
        %1086 = vmatpush1.bf16.msra.mxu0 %v800
        %1087 = vmatprep.subr.bf16.mxu0 %v797
        %1088 = vmatpush1.bf16.msra.mxu0 %v796
        %1089 = vmatprep.subr.bf16.mxu0 %v793
        %1090 = vmatpush1.bf16.msra.mxu0 %v792
        %1091 = vmatprep.subr.bf16.mxu0 %v789
        %1092 = vmatpush1.bf16.msra.mxu0 %v788
        %1093 = vmatprep.subr.bf16.mxu0 %v785
        %1094 = vmatpush1.bf16.msra.mxu0 %v784
        %1095 = vmatprep.subr.bf16.mxu0 %v781
        %1096 = vmatpush1.bf16.msra.mxu0 %v780
        %1097 = vmatprep.subr.bf16.mxu0 %v777
        %1098 = vmatpush1.bf16.msra.mxu0 %v776
        %1099 = vmatprep.subr.bf16.mxu0 %v773
        %1100 = vmatpush1.bf16.msra.mxu0 %v772
        %1101 = vmatprep.subr.bf16.mxu0 %v833
        %1102 = vmatpush2.bf16.msra.mxu0 %v832
        %1103 = vmatprep.subr.bf16.mxu0 %v829
        %1104 = vmatpush2.bf16.msra.mxu0 %v828
        %1105 = vmatprep.subr.bf16.mxu0 %v825
        %1106 = vmatpush2.bf16.msra.mxu0 %v824
        %1107 = vmatprep.subr.bf16.mxu0 %v821
        %1108 = vmatpush2.bf16.msra.mxu0 %v820
        %1109 = vmatprep.subr.bf16.mxu0 %v817
        %1110 = vmatpush2.bf16.msra.mxu0 %v816
        %1111 = vmatprep.subr.bf16.mxu0 %v813
        %1112 = vmatpush2.bf16.msra.mxu0 %v812
        %1113 = vmatprep.subr.bf16.mxu0 %v809
        %1114 = vmatpush2.bf16.msra.mxu0 %v808
        %1115 = vmatprep.subr.bf16.mxu0 %v805
        %1116 = vmatpush2.bf16.msra.mxu0 %v804
        %1117 = vmatprep.mubr.bf16.mxu0 %v317
        %1118 = vmatmul.mubr.bf16.gmra.mxu0 %v316
        %v1119 = vpop.f32.mrf.mxu0
        %v1120 = vadd.f32 %v1079, %v1119
        %v1121 = vpop.f32.mrf.mxu0
        %v1122 = vadd.f32 %v1081, %v1121
        %v1123 = vpop.f32.mrf.mxu0
        %v1124 = vpop.f32.mrf.mxu0
        %1125 = vdwg.mxu0
        %v1130 = vcombine.low %v1038, %v1040
        %v1131 = vcombine.low %v1120, %v1122
        %v1133 = vunpack.c.l.s4 1983009808
        %v1134 = vunpack.c.0.s8 %v1133
        %v1135 = vlaneseq
        %v1136 = vshrl.u32 %v1135, 7
        %v1137 = vsub.s32 %v1134, %v1136
        %v1138 = vrot.slane %v1130, %v1137
        %v1140 = vunpack.c.l.s4 1983009808
        %v1141 = vunpack.c.0.s8 %v1140
        %v1142 = vlaneseq
        %v1143 = vshrl.u32 %v1142, 7
        %v1144 = vsub.s32 %v1141, %v1143
        %v1145 = vrot.slane %v1131, %v1144
        %v1146 = vcombine.low %v1138, %v1145
        %1148 = vst [vmem:[%s161] sm:$0xff] %v1146
        %s1149 = sand.u32 %s74, 1
        %s1150 = scalar_lea.sflag [#allocation4], %s1149
        %s1151 = sand.u32 %s74, 1
        %s1152 = smul.addr %s1151, 8
        %s1153 = scalar_lea.vmem [#allocation5], %s1152
        // Predicated region
        $region33: #{pallas_matvec.1} parent=27 // pred_check
          %p1154 = pneg %p84
        $region34: #{pallas_matvec.1} parent=27 // pred_check_branch
          %1156 = sbr.rel (%p1154) target = $region36
        $region35: #{pallas_matvec.1} parent=27 // pred_region
          %s1157 = smul.u32 4, %s19
          %s1159 = ssub.s32 128, 128
          %1160 = vsyncadd %s1150, %s1159
          %s1161 = smul.addr %s1157, 32
          %s1162 = scalar_lea.hbm %s2, %s1161
          %s1164 = sshll.u32 %s1153, 4
          %s1165 = int_to_ptr.vmem [resolvable:$true] %s1164
          %1167 = dma.vmem_to_hbm [thread:$0]  %s1165, 128, %s1162, %s1150
        $region36: #{pallas_matvec.1} parent=27 // pred_fallthru
          _
      $region28: #{pallas_matvec.1} parent=5 // pred_fallthru
        _
      %p1168 = scmp.le.s32.totalorder 2, %s14
      // Predicated region
      $region37: #{pallas_matvec.1} parent=5 // pred_check
        %p1169 = pneg %p1168
      $region38: #{pallas_matvec.1} parent=5 // pred_check_branch
        %1171 = sbr.rel (%p1169) target = $region40
      $region39: #{pallas_matvec.1} parent=5 // pred_region
        %s1172 = ssub.s32 %s14, 2
        // Predicated region
        $region41: #{pallas_matvec.1} parent=39 // pred_check
          %p1173 = pneg %p90
        $region42: #{pallas_matvec.1} parent=39 // pred_check_branch
          %1175 = sbr.rel (%p1173) target = $region44
        $region43: #{pallas_matvec.1} parent=39 // pred_region
          %s1176 = sand.u32 %s75, 1
          %s1177 = scalar_lea.sflag [#allocation4], %s1176
          %s1178 = sand.u32 %s75, 1
          %s1179 = smul.addr %s1178, 8
          %s1180 = scalar_lea.vmem [#allocation5], %s1179
          %1181 = dma.done %s1177, 128
        $region44: #{pallas_matvec.1} parent=39 // pred_fallthru
          _
      $region40: #{pallas_matvec.1} parent=5 // pred_fallthru
        _
    $region6: #{pallas_matvec.1} parent=1 // loop_footer
      %s18 = sadd.s32 1, %s14
    $region7: #{pallas_matvec.1} parent=1 // loop_footer_branch
      %13 = sbr.rel target = $region3
    $region8: #{pallas_matvec.1} parent=1 // loop_exit
      _
    %1182 = vsyncpa [#allocation3], 1
    %s1183 = scalar_lea.sflag [#allocation3], 1
    %1184 = vsyncpa %s1183, 1
    %1185 = vsyncpa [#allocation4], 1
    %s1186 = scalar_lea.sflag [#allocation4], 1
    %1187 = vsyncpa %s1186, 1

</llo_original>
